<compile_context>
chip_gen: v7x
topology: tpu7x:2x2x1
jax: 0.10.0
libtpu: 0.0.40
codegen_flags: <defaults>
</compile_context>

<pallas_src>
import functools

import numpy as np
import jax
import jax.numpy as jnp
from jax import lax
from jax.experimental import pallas as pl
from jax.experimental.pallas import tpu as pltpu

N_SOURCE_NODES = 8
N_TARGET_NODES = 16
BN_EPS = 1e-3


def _round_up(v, m):
    return (v + m - 1) // m * m


def _static_layout(n, e, fs, ft):
    """Row offsets of blocks inside the static f32 constant slab (8-aligned)."""
    k1, k3 = fs * fs, fs * ft
    off = {}
    r = 0
    for name, rows in (("G", e), ("S", n), ("P1", fs), ("R1", k1),
                       ("P3", fs), ("R3", k3), ("W1", fs), ("W3", fs),
                       ("PM1", n), ("PM3", n), ("VEC", 8)):
        off[name] = r
        r += _round_up(rows, 8)
    off["rows"] = r
    return off


# ------------------------------- kernel ------------------------------------

def _generator_kernel(dyn_ref, const_ref, out_ref, pad_ref, *, n, e, fs, ft):
    f32 = jnp.float32
    k1, k3 = fs * fs, fs * ft
    L = _static_layout(n, e, fs, ft)
    vec = L["VEC"]

    x = dyn_ref[0:n, 0:fs]                        # [N, fs]  node features
    ea = dyn_ref[n:n + e, 0:1]                    # [E, 1]   edge attribute
    G = const_ref[L["G"]:L["G"] + e, 0:n]         # [E, N]   one-hot source gather
    S = const_ref[L["S"]:L["S"] + n, 0:e]         # [N, E]   one-hot target scatter

    def nnconv(h, P, R, Wr, pm, A, b, bias):
        # Edge network: Linear(1, fin*fout) + ReLU (input dim 1 -> broadcast FMA).
        We = jnp.maximum(ea * A + b, 0.0)                               # [E, K]
        # Lane-dense gather+repeat via exact 0/1 matmuls:
        #   xj_rep[e, f*fout+o] = h[src(e), f]
        hP = jnp.dot(h, P, preferred_element_type=f32)                  # [N, K]
        xj_rep = jnp.dot(G, hP, preferred_element_type=f32)             # [E, K]
        prod = xj_rep * We                                              # [E, K]
        # Scatter-sum to target nodes, reduce over fin.  1/deg ('mean') and the
        # BatchNorm scale are folded into the tiny per-node post-multiplier pm.
        sm = jnp.dot(S, prod, preferred_element_type=f32)               # [N, K]
        agg = jnp.dot(sm, R, preferred_element_type=f32)                # [N, fout]
        root = jnp.dot(h, Wr, preferred_element_type=f32)               # [N, fout]
        return jax.nn.sigmoid(agg * pm + root + bias)

    # ---- layer 1: conv1 -> conv11 (folded BN) -> sigmoid -> dropout(identity) ----
    h1 = nnconv(x,
                const_ref[L["P1"]:L["P1"] + fs, 0:k1],
                const_ref[L["R1"]:L["R1"] + k1, 0:fs],
                const_ref[L["W1"]:L["W1"] + fs, 0:fs],
                const_ref[L["PM1"]:L["PM1"] + n, 0:fs],
                const_ref[vec + 0:vec + 1, 0:k1],
                const_ref[vec + 1:vec + 2, 0:k1],
                const_ref[vec + 4:vec + 5, 0:fs])
    # TODO(synk): F.dropout with training=True is stochastic; eval-mode (identity) implemented.

    # ---- layer 3: conv3 -> conv33 (folded BN) -> sigmoid -> dropout(identity) ----
    h3 = nnconv(h1,
                const_ref[L["P3"]:L["P3"] + fs, 0:k3],
                const_ref[L["R3"]:L["R3"] + k3, 0:ft],
                const_ref[L["W3"]:L["W3"] + fs, 0:ft],
                const_ref[L["PM3"]:L["PM3"] + n, 0:ft],
                const_ref[vec + 2:vec + 3, 0:k3],
                const_ref[vec + 3:vec + 4, 0:k3],
                const_ref[vec + 5:vec + 6, 0:ft])

    # ---- x4 = x3.T @ x3, normalize by global max, diagonal <- 1 ----------------
    # Lane-dense output: pad h3 into a zeroed [N, 128] scratch used as the RHS so
    # the output slab is a dense (ft, 128) write (padded lanes are exactly 0 and
    # never affect the max, since all real entries are positive sigmoid products).
    pad_ref[...] = jnp.zeros_like(pad_ref)
    pad_ref[:, 0:ft] = h3
    x4 = lax.dot_general(h3, pad_ref[...], (((0,), (0,)), ((), ())),
                         preferred_element_type=f32)                    # [ft, 128]
    inv_mx = pl.reciprocal(jnp.max(x4, keepdims=True))                  # exact 1/max
    x4 = x4 * inv_mx
    row = lax.broadcasted_iota(jnp.int32, x4.shape, 0)
    col = lax.broadcasted_iota(jnp.int32, x4.shape, 1)
    out_ref[...] = jnp.where(row == col, jnp.float32(1.0), x4)


# ------------------------------ wrapper -------------------------------------

@functools.partial(jax.jit, static_argnames=("n", "e", "fs", "ft"))
def generator_forward(x, edge_attr, const_slab, *, n, e, fs, ft):
    # Pack the dynamic inputs (x + edge_attr) into one DMA-friendly f32 slab.
    rows = _round_up(n + e, 8)
    ea = jnp.pad(edge_attr.astype(jnp.float32),
                 ((0, rows - n - e), (0, fs - 1)))
    dyn = jnp.concatenate([x.astype(jnp.float32), ea], axis=0)          # [rows, fs]

    kernel = functools.partial(_generator_kernel, n=n, e=e, fs=fs, ft=ft)

    def layer_macs(fin, fout):
        k = fin * fout
        return n * fin * k + e * n * k + n * e * k + n * k * fout + n * fin * fout

    flops = 2 * (layer_macs(fs, fs) + layer_macs(fs, ft) + n * ft * 128) \
        + 4 * e * (fs * fs + fs * ft)
    transcendentals = n * (fs + ft)
    bytes_accessed = (dyn.size + const_slab.size + ft * 128) * 4

    # NOTE(v7x): a single un-gridded call runs on one TensorCore.  With >=2
    # graphs per step, add a leading 'parallel' grid axis (topology constants
    # are shared) or batch graphs along lanes to use both cores / wider MXUs.
    out = pl.pallas_call(
        kernel,
        out_shape=jax.ShapeDtypeStruct((ft, 128), jnp.float32),
        in_specs=[pl.BlockSpec(memory_space=pltpu.MemorySpace.VMEM)] * 2,
        out_specs=pl.BlockSpec(memory_space=pltpu.MemorySpace.VMEM),
        scratch_shapes=[pltpu.VMEM((n, 128), jnp.float32)],
        cost_estimate=pl.CostEstimate(flops=int(flops),
                                      transcendentals=int(transcendentals),
                                      bytes_accessed=int(bytes_accessed)),
    )(dyn, const_slab)
    return out[:, :ft]


# ---------------------- parameter / graph / packing setup -------------------

def init_params(key, fs, ft):
    ks = jax.random.split(key, 16)

    def u(k, shape, scale=0.3):
        return jax.random.uniform(k, shape, jnp.float32, -scale, scale)

    # conv1: NNConv(fs -> fs), edge nn = Linear(1, fs*fs) + ReLU; BN over fs.
    A1, b1 = u(ks[0], (1, fs * fs)), u(ks[1], (1, fs * fs))
    Wr1, bias1 = u(ks[2], (fs, fs)), u(ks[3], (1, fs))
    g1 = 1.0 + u(ks[4], (1, fs), 0.1)
    be1 = u(ks[5], (1, fs), 0.1)
    rm1 = u(ks[6], (1, fs), 0.1)
    rv1 = 1.0 + u(ks[7], (1, fs), 0.2)
    # conv3: NNConv(fs -> ft), edge nn = Linear(1, fs*ft) + ReLU; BN over ft.
    A3, b3 = u(ks[8], (1, fs * ft)), u(ks[9], (1, fs * ft))
    Wr3, bias3 = u(ks[10], (fs, ft)), u(ks[11], (1, ft))
    g3 = 1.0 + u(ks[12], (1, ft), 0.1)
    be3 = u(ks[13], (1, ft), 0.1)
    rm3 = u(ks[14], (1, ft), 0.1)
    rv3 = 1.0 + u(ks[15], (1, ft), 0.2)
    return (A1, b1, Wr1, bias1, g1, be1, rm1, rv1,
            A3, b3, Wr3, bias3, g3, be3, rm3, rv3)


def build_full_graph(n):
    # Fully connected directed graph without self-loops.
    src, tgt = [], []
    for i in range(n):
        for j in range(n):
            if i != j:
                src.append(i)
                tgt.append(j)
    return np.asarray(src, np.int64), np.asarray(tgt, np.int64)


def build_static_slab(src, tgt, params, n, fs, ft):
    """Pack graph topology + all (BN-folded) parameters into one f32 slab."""
    (A1, b1, Wr1, bias1, g1, be1, rm1, rv1,
     A3, b3, Wr3, bias3, g3, be3, rm3, rv3) = [np.asarray(p, np.float32)
                                               for p in params]
    e = len(src)
    k1, k3 = fs * fs, fs * ft
    L = _static_layout(n, e, fs, ft)
    slab = np.zeros((L["rows"], 128), np.float32)

    # Graph: one-hot gather/scatter matrices + per-node 1/deg ('mean' aggr).
    G = np.zeros((e, n), np.float32)
    G[np.arange(e), src] = 1.0
    S = np.zeros((n, e), np.float32)
    S[tgt, np.arange(e)] = 1.0
    deg = np.bincount(tgt, minlength=n).astype(np.float32)
    inv_deg = 1.0 / np.maximum(deg, 1.0)                                 # [N]

    # Expand/reduce 0/1 matrices:
    #   P[f, f*fout+o] = 1   (h @ P repeats each feature fout times, lane-dense)
    #   R[f*fout+o, o] = 1   (prod @ R sums over the fin axis)
    def expand_mat(fin, fout):
        m = np.zeros((fin, fin * fout), np.float32)
        for f in range(fin):
            m[f, f * fout:(f + 1) * fout] = 1.0
        return m

    def reduce_mat(fin, fout):
        m = np.zeros((fin * fout, fout), np.float32)
        for f in range(fin):
            m[f * fout + np.arange(fout), np.arange(fout)] = 1.0
        return m

    # Fold eval-mode BatchNorm: y*scale + shift, scale = g/sqrt(rv+eps).
    def fold_bn(g, be, rm, rv):
        s = (g / np.sqrt(rv + BN_EPS)).reshape(-1)
        return s, be.reshape(-1) - rm.reshape(-1) * s

    s1, sh1 = fold_bn(g1, be1, rm1, rv1)
    s3, sh3 = fold_bn(g3, be3, rm3, rv3)

    def put(name, mat):
        r = L[name]
        mat = np.asarray(mat, np.float32)
        slab[r:r + mat.shape[0], 0:mat.shape[1]] = mat

    put("G", G)
    put("S", S)
    put("P1", expand_mat(fs, fs))
    put("R1", reduce_mat(fs, fs))
    put("P3", expand_mat(fs, ft))
    put("R3", reduce_mat(fs, ft))
    put("W1", Wr1 * s1[None, :])                     # BN scale folded into root weight
    put("W3", Wr3 * s3[None, :])
    put("PM1", inv_deg[:, None] * s1[None, :])       # 1/deg (x) BN scale, per node
    put("PM3", inv_deg[:, None] * s3[None, :])

    vec = np.zeros((8, 128), np.float32)
    vec[0, :k1] = A1.reshape(-1)
    vec[1, :k1] = b1.reshape(-1)
    vec[2, :k3] = A3.reshape(-1)
    vec[3, :k3] = b3.reshape(-1)
    vec[4, :fs] = bias1.reshape(-1) * s1 + sh1       # bias*scale + shift
    vec[5, :ft] = bias3.reshape(-1) * s3 + sh3
    slab[L["VEC"]:L["VEC"] + 8, :] = vec
    return jnp.asarray(slab)


# ------------------------------ reference -----------------------------------

def reference_forward(x, ea, G, S_mean, params, fs, ft):
    (A1, b1, Wr1, bias1, g1, be1, rm1, rv1,
     A3, b3, Wr3, bias3, g3, be3, rm3, rv3) = params
    hp = lax.Precision.HIGHEST

    def nnconv(h, A, b, Wr, bias, fin, fout):
        We = jnp.maximum(ea * A + b, 0.0).reshape(-1, fin, fout)
        xj = jnp.dot(G, h, precision=hp)
        m = jnp.einsum("ef,efo->eo", xj, We, precision=hp)
        return jnp.dot(S_mean, m, precision=hp) + jnp.dot(h, Wr, precision=hp) + bias

    def bn(h, g, be, rm, rv):
        return (h - rm) * lax.rsqrt(rv + BN_EPS) * g + be

    h = jax.nn.sigmoid(bn(nnconv(x, A1, b1, Wr1, bias1, fs, fs), g1, be1, rm1, rv1))
    h = jax.nn.sigmoid(bn(nnconv(h, A3, b3, Wr3, bias3, fs, ft), g3, be3, rm3, rv3))
    x4 = jnp.dot(h.T, h, precision=hp)
    x4 = x4 / jnp.max(x4)
    return x4.at[jnp.arange(ft), jnp.arange(ft)].set(1.0)


if __name__ == "__main__":
    fs, ft = N_SOURCE_NODES, N_TARGET_NODES
    n_nodes = fs                                  # x is [N_SOURCE_NODES, N_SOURCE_NODES]

    key = jax.random.PRNGKey(0)
    k_x, k_e, k_p = jax.random.split(key, 3)

    src, tgt = build_full_graph(n_nodes)
    n_edges = len(src)
    x = jax.random.uniform(k_x, (n_nodes, fs), jnp.float32)
    edge_attr = jax.random.uniform(k_e, (n_edges, 1), jnp.float32)
    params = init_params(k_p, fs, ft)

    const_slab = build_static_slab(src, tgt, params, n_nodes, fs, ft)
    out = generator_forward(x, edge_attr, const_slab,
                            n=n_nodes, e=n_edges, fs=fs, ft=ft)
    out = jax.block_until_ready(out)

    # f32 reference (eval-mode forward of the PyTorch module).
    G_f32 = np.zeros((n_edges, n_nodes), np.float32)
    G_f32[np.arange(n_edges), src] = 1.0
    deg = np.bincount(tgt, minlength=n_nodes).astype(np.float32)
    S_mean = np.zeros((n_nodes, n_edges), np.float32)
    S_mean[tgt, np.arange(n_edges)] = 1.0
    S_mean /= np.maximum(deg, 1.0)[:, None]
    ref = reference_forward(x, edge_attr, jnp.asarray(G_f32), jnp.asarray(S_mean),
                            params, fs, ft)

    np.testing.assert_allclose(np.asarray(out), np.asarray(ref), rtol=1e-3, atol=1e-3)
    assert out.shape == (ft, ft)
    print("KERNEL_OK")
</pallas_src>

<mosaic_0001>
module attributes {stable_mosaic.version = 11 : i64} {
  func.func @_generator_kernel(%arg0: memref<64x8xf32, #tpu.memory_space<vmem>>, %arg1: memref<312x128xf32, #tpu.memory_space<vmem>>, %arg2: memref<16x128xf32, #tpu.memory_space<vmem>>, %arg3: memref<8x128xf32, #tpu.memory_space<vmem>>) attributes {dimension_semantics = [], scalar_prefetch = 0 : i64, scratch_operands = 1 : i64, tpu.core_type = #tpu.core_type<tc>} {
    %c0 = arith.constant 0 : index
    %c0_0 = arith.constant 0 : index
    %0 = vector.load %arg0[%c0, %c0_0] : memref<64x8xf32, #tpu.memory_space<vmem>>, vector<8x8xf32>
    %c8 = arith.constant 8 : index
    %c0_1 = arith.constant 0 : index
    %1 = vector.load %arg0[%c8, %c0_1] : memref<64x8xf32, #tpu.memory_space<vmem>>, vector<56x1xf32>
    %c0_2 = arith.constant 0 : index
    %c0_3 = arith.constant 0 : index
    %2 = vector.load %arg1[%c0_2, %c0_3] : memref<312x128xf32, #tpu.memory_space<vmem>>, vector<56x8xf32>
    %c56 = arith.constant 56 : index
    %c0_4 = arith.constant 0 : index
    %3 = vector.load %arg1[%c56, %c0_4] : memref<312x128xf32, #tpu.memory_space<vmem>>, vector<8x56xf32>
    %c64 = arith.constant 64 : index
    %c0_5 = arith.constant 0 : index
    %4 = vector.load %arg1[%c64, %c0_5] : memref<312x128xf32, #tpu.memory_space<vmem>>, vector<8x64xf32>
    %c72 = arith.constant 72 : index
    %c0_6 = arith.constant 0 : index
    %5 = vector.load %arg1[%c72, %c0_6] : memref<312x128xf32, #tpu.memory_space<vmem>>, vector<64x8xf32>
    %c272 = arith.constant 272 : index
    %c0_7 = arith.constant 0 : index
    %6 = vector.load %arg1[%c272, %c0_7] : memref<312x128xf32, #tpu.memory_space<vmem>>, vector<8x8xf32>
    %c288 = arith.constant 288 : index
    %c0_8 = arith.constant 0 : index
    %7 = vector.load %arg1[%c288, %c0_8] : memref<312x128xf32, #tpu.memory_space<vmem>>, vector<8x8xf32>
    %c304 = arith.constant 304 : index
    %c0_9 = arith.constant 0 : index
    %8 = vector.load %arg1[%c304, %c0_9] : memref<312x128xf32, #tpu.memory_space<vmem>>, vector<1x64xf32>
    %c305 = arith.constant 305 : index
    %c0_10 = arith.constant 0 : index
    %9 = vector.load %arg1[%c305, %c0_10] : memref<312x128xf32, #tpu.memory_space<vmem>>, vector<1x64xf32>
    %c308 = arith.constant 308 : index
    %c0_11 = arith.constant 0 : index
    %10 = vector.load %arg1[%c308, %c0_11] : memref<312x128xf32, #tpu.memory_space<vmem>>, vector<1x8xf32>
    %11 = vector.broadcast %1 : vector<56x1xf32> to vector<56x64xf32>
    %12 = vector.broadcast %8 : vector<1x64xf32> to vector<56x64xf32>
    %13 = arith.mulf %11, %12 : vector<56x64xf32>
    %14 = vector.broadcast %9 : vector<1x64xf32> to vector<56x64xf32>
    %15 = arith.addf %13, %14 : vector<56x64xf32>
    %cst = arith.constant 0.000000e+00 : f32
    %16 = vector.broadcast %cst : f32 to vector<56x64xf32>
    %17 = arith.maximumf %15, %16 : vector<56x64xf32>
    %cst_12 = arith.constant dense<0.000000e+00> : vector<8x64xf32>
    %18 = tpu.matmul %0, %4, %cst_12 {dimension_numbers = #tpu.dot_dimension_numbers<[1], [0], [0], [1], [0, 0, 1, 1], [], []>} : vector<8x8xf32>, vector<8x64xf32>, vector<8x64xf32> -> vector<8x64xf32>
    %cst_13 = arith.constant dense<0.000000e+00> : vector<56x64xf32>
    %19 = tpu.matmul %2, %18, %cst_13 {dimension_numbers = #tpu.dot_dimension_numbers<[1], [0], [0], [1], [0, 0, 1, 1], [], []>} : vector<56x8xf32>, vector<8x64xf32>, vector<56x64xf32> -> vector<56x64xf32>
    %20 = arith.mulf %19, %17 : vector<56x64xf32>
    %cst_14 = arith.constant dense<0.000000e+00> : vector<8x64xf32>
    %21 = tpu.matmul %3, %20, %cst_14 {dimension_numbers = #tpu.dot_dimension_numbers<[1], [0], [0], [1], [0, 0, 1, 1], [], []>} : vector<8x56xf32>, vector<56x64xf32>, vector<8x64xf32> -> vector<8x64xf32>
    %cst_15 = arith.constant dense<0.000000e+00> : vector<8x8xf32>
    %22 = tpu.matmul %21, %5, %cst_15 {dimension_numbers = #tpu.dot_dimension_numbers<[1], [0], [0], [1], [0, 0, 1, 1], [], []>} : vector<8x64xf32>, vector<64x8xf32>, vector<8x8xf32> -> vector<8x8xf32>
    %cst_16 = arith.constant dense<0.000000e+00> : vector<8x8xf32>
    %23 = tpu.matmul %0, %6, %cst_16 {dimension_numbers = #tpu.dot_dimension_numbers<[1], [0], [0], [1], [0, 0, 1, 1], [], []>} : vector<8x8xf32>, vector<8x8xf32>, vector<8x8xf32> -> vector<8x8xf32>
    %24 = arith.mulf %22, %7 : vector<8x8xf32>
    %25 = arith.addf %24, %23 : vector<8x8xf32>
    %26 = vector.broadcast %10 : vector<1x8xf32> to vector<8x8xf32>
    %27 = arith.addf %25, %26 : vector<8x8xf32>
    %28 = arith.negf %27 : vector<8x8xf32>
    %29 = math.exp %28 : vector<8x8xf32>
    %cst_17 = arith.constant 1.000000e+00 : f32
    %30 = vector.broadcast %cst_17 : f32 to vector<8x8xf32>
    %31 = arith.addf %30, %29 : vector<8x8xf32>
    %32 = arith.divf %30, %31 : vector<8x8xf32>
    %c136 = arith.constant 136 : index
    %c0_18 = arith.constant 0 : index
    %33 = vector.load %arg1[%c136, %c0_18] : memref<312x128xf32, #tpu.memory_space<vmem>>, vector<8x128xf32>
    %c144 = arith.constant 144 : index
    %c0_19 = arith.constant 0 : index
    %34 = vector.load %arg1[%c144, %c0_19] : memref<312x128xf32, #tpu.memory_space<vmem>>, vector<128x16xf32>
    %c280 = arith.constant 280 : index
    %c0_20 = arith.constant 0 : index
    %35 = vector.load %arg1[%c280, %c0_20] : memref<312x128xf32, #tpu.memory_space<vmem>>, vector<8x16xf32>
    %c296 = arith.constant 296 : index
    %c0_21 = arith.constant 0 : index
    %36 = vector.load %arg1[%c296, %c0_21] : memref<312x128xf32, #tpu.memory_space<vmem>>, vector<8x16xf32>
    %c306 = arith.constant 306 : index
    %c0_22 = arith.constant 0 : index
    %37 = vector.load %arg1[%c306, %c0_22] : memref<312x128xf32, #tpu.memory_space<vmem>>, vector<1x128xf32>
    %c307 = arith.constant 307 : index
    %c0_23 = arith.constant 0 : index
    %38 = vector.load %arg1[%c307, %c0_23] : memref<312x128xf32, #tpu.memory_space<vmem>>, vector<1x128xf32>
    %c309 = arith.constant 309 : index
    %c0_24 = arith.constant 0 : index
    %39 = vector.load %arg1[%c309, %c0_24] : memref<312x128xf32, #tpu.memory_space<vmem>>, vector<1x16xf32>
    %40 = vector.broadcast %1 : vector<56x1xf32> to vector<56x128xf32>
    %41 = vector.broadcast %37 : vector<1x128xf32> to vector<56x128xf32>
    %42 = arith.mulf %40, %41 : vector<56x128xf32>
    %43 = vector.broadcast %38 : vector<1x128xf32> to vector<56x128xf32>
    %44 = arith.addf %42, %43 : vector<56x128xf32>
    %cst_25 = arith.constant 0.000000e+00 : f32
    %45 = vector.broadcast %cst_25 : f32 to vector<56x128xf32>
    %46 = arith.maximumf %44, %45 : vector<56x128xf32>
    %cst_26 = arith.constant dense<0.000000e+00> : vector<8x128xf32>
    %47 = tpu.matmul %32, %33, %cst_26 {dimension_numbers = #tpu.dot_dimension_numbers<[1], [0], [0], [1], [0, 0, 1, 1], [], []>} : vector<8x8xf32>, vector<8x128xf32>, vector<8x128xf32> -> vector<8x128xf32>
    %cst_27 = arith.constant dense<0.000000e+00> : vector<56x128xf32>
    %48 = tpu.matmul %2, %47, %cst_27 {dimension_numbers = #tpu.dot_dimension_numbers<[1], [0], [0], [1], [0, 0, 1, 1], [], []>} : vector<56x8xf32>, vector<8x128xf32>, vector<56x128xf32> -> vector<56x128xf32>
    %49 = arith.mulf %48, %46 : vector<56x128xf32>
    %cst_28 = arith.constant dense<0.000000e+00> : vector<8x128xf32>
    %50 = tpu.matmul %3, %49, %cst_28 {dimension_numbers = #tpu.dot_dimension_numbers<[1], [0], [0], [1], [0, 0, 1, 1], [], []>} : vector<8x56xf32>, vector<56x128xf32>, vector<8x128xf32> -> vector<8x128xf32>
    %cst_29 = arith.constant dense<0.000000e+00> : vector<8x16xf32>
    %51 = tpu.matmul %50, %34, %cst_29 {dimension_numbers = #tpu.dot_dimension_numbers<[1], [0], [0], [1], [0, 0, 1, 1], [], []>} : vector<8x128xf32>, vector<128x16xf32>, vector<8x16xf32> -> vector<8x16xf32>
    %cst_30 = arith.constant dense<0.000000e+00> : vector<8x16xf32>
    %52 = tpu.matmul %32, %35, %cst_30 {dimension_numbers = #tpu.dot_dimension_numbers<[1], [0], [0], [1], [0, 0, 1, 1], [], []>} : vector<8x8xf32>, vector<8x16xf32>, vector<8x16xf32> -> vector<8x16xf32>
    %53 = arith.mulf %51, %36 : vector<8x16xf32>
    %54 = arith.addf %53, %52 : vector<8x16xf32>
    %55 = vector.broadcast %39 : vector<1x16xf32> to vector<8x16xf32>
    %56 = arith.addf %54, %55 : vector<8x16xf32>
    %57 = arith.negf %56 : vector<8x16xf32>
    %58 = math.exp %57 : vector<8x16xf32>
    %cst_31 = arith.constant 1.000000e+00 : f32
    %59 = vector.broadcast %cst_31 : f32 to vector<8x16xf32>
    %60 = arith.addf %59, %58 : vector<8x16xf32>
    %61 = arith.divf %59, %60 : vector<8x16xf32>
    %cst_32 = arith.constant 0.000000e+00 : f32
    %62 = vector.broadcast %cst_32 : f32 to vector<8x128xf32>
    %c0_33 = arith.constant 0 : index
    %c0_34 = arith.constant 0 : index
    %63 = vector.load %arg3[%c0_33, %c0_34] : memref<8x128xf32, #tpu.memory_space<vmem>>, vector<8x128xf32>
    tpu.vector_store %arg3[%c0_33, %c0_34], %62 {strides = array<i32>} : memref<8x128xf32, #tpu.memory_space<vmem>>, vector<8x128xf32>,
    %c0_35 = arith.constant 0 : index
    %c0_36 = arith.constant 0 : index
    %64 = vector.load %arg3[%c0_35, %c0_36] : memref<8x128xf32, #tpu.memory_space<vmem>>, vector<8x16xf32>
    tpu.vector_store %arg3[%c0_35, %c0_36], %61 {strides = array<i32>} : memref<8x128xf32, #tpu.memory_space<vmem>>, vector<8x16xf32>,
    %c0_37 = arith.constant 0 : index
    %c0_38 = arith.constant 0 : index
    %65 = vector.load %arg3[%c0_37, %c0_38] : memref<8x128xf32, #tpu.memory_space<vmem>>, vector<8x128xf32>
    %cst_39 = arith.constant dense<0.000000e+00> : vector<16x128xf32>
    %66 = tpu.matmul %61, %65, %cst_39 {dimension_numbers = #tpu.dot_dimension_numbers<[0], [0], [1], [1], [0, 1, 1, 1], [], []>} : vector<8x16xf32>, vector<8x128xf32>, vector<16x128xf32> -> vector<16x128xf32>
    %67 = vector.shape_cast %66 : vector<16x128xf32> to vector<1x16x128xf32>
    %cst_40 = arith.constant dense<0xFF800000> : vector<1xf32>
    %68 = vector.multi_reduction <maximumf>, %67, %cst_40 [1, 2] : vector<1x16x128xf32> to vector<1xf32>
    %69 = vector.shape_cast %68 : vector<1xf32> to vector<1x1x1xf32>
    %70 = vector.extract %69[0, 0, 0] : f32 from vector<1x1x1xf32>
    %71 = vector.broadcast %70 : f32 to vector<1x1xf32>
    %72 = tpu.reciprocal %71 : vector<1x1xf32> -> vector<1x1xf32>
    %73 = vector.broadcast %72 : vector<1x1xf32> to vector<16x128xf32>
    %74 = arith.mulf %66, %73 : vector<16x128xf32>
    %75 = tpu.iota {dimensions = array<i32: 0>} : vector<16x128xi32>
    %76 = tpu.iota {dimensions = array<i32: 1>} : vector<16x128xi32>
    %77 = arith.cmpi eq, %75, %76 : vector<16x128xi32>
    %cst_41 = arith.constant 1.000000e+00 : f32
    %78 = vector.broadcast %cst_41 : f32 to vector<16x128xf32>
    %79 = arith.select %77, %78, %74 : vector<16x128xi1>, vector<16x128xf32>
    %c0_42 = arith.constant 0 : index
    %c0_43 = arith.constant 0 : index
    %80 = vector.load %arg2[%c0_42, %c0_43] : memref<16x128xf32, #tpu.memory_space<vmem>>, vector<16x128xf32>
    tpu.vector_store %arg2[%c0_42, %c0_43], %79 {strides = array<i32>} : memref<16x128xf32, #tpu.memory_space<vmem>>, vector<16x128xf32>,
    return
  }
}

</mosaic_0001>

<llo_original>
// kernel: generator_forward.1
$region0: #{generator_forward.1}
  #allocation0 [shape = 'u32[]', space=smem, size = 0x4, offset = 0x4, fixed_abs, tag = 'smem constant byte address 0x4 - core index']
  #allocation1 [shape = 'u32[144,128]{1,0:T(1,128)}', space=vmem, size = 0x12000, scoped, tag = 'internal scratch']
  #allocation2 [shape = 'f32[8,128]{1,0:T(8,128)}', space=vmem, size = 0x1000, scoped, tag = 'scratch operand']
  %s0 = inlined_call_operand.vmem [shape: f32[64,8], index: 0, kind: input, shape index: {}]
  %s1 = inlined_call_operand.hbm [shape: f32[312,128], index: 1, kind: input, shape index: {}]
  %s2 = inlined_call_operand.hbm [shape: f32[16,128], index: 2, kind: output, shape index: {}]
  %s3 = sld [smem:[#allocation0]]
  $region22: #{generator_forward.1} parent=0
    _
  %s5 = ssub.s32 1, %s3
  %s6 = scalar_select 0, %s5, %s3
  $region1: #{generator_forward.1} parent=0
    #allocation3 [shape = 'u8[159744]{0}', space=vmem, size = 0x27000, scoped, tag = 'input window, operand 1, single buffered']
    #allocation4 [shape = 's32[1]{0}', space=sflag, size = 0x4, scoped, tag = 'scoped memory for generator_forward.1']
    #allocation5 [shape = 's32[1]{0}', space=sflag, size = 0x4, scoped, tag = 'scoped memory for generator_forward.1']
    #allocation6 [shape = 'u8[8192]{0}', space=vmem, size = 0x2000, scoped, tag = 'output window, operand 0, single buffered']
    %7 = vsyncpa [#allocation4], 0
    %8 = vsyncpa [#allocation5], 0
    // Predicated region
    $region2: #{generator_forward.1} parent=1 // pred_check
      _
    $region3: #{generator_forward.1} parent=1 // pred_check_branch
      %10 = sbr.rel (0) target = $region5
    $region4: #{generator_forward.1} parent=1 // pred_region
      _
    $region5: #{generator_forward.1} parent=1 // pred_fallthru
      _
    // Predicated region
    $region6: #{generator_forward.1} parent=1 // pred_check
      _
    $region7: #{generator_forward.1} parent=1 // pred_check_branch
      %12 = sbr.rel (0) target = $region9
    $region8: #{generator_forward.1} parent=1 // pred_region
      %s14 = ssub.s32 4992, 4992
      %15 = vsyncadd [#allocation4], %s14
      %s16 = sshll.u32 [#allocation3], 4
      %s17 = int_to_ptr.vmem [resolvable:$true] %s16
      %22 = dma.hbm_to_vmem [thread:$0]  %s1, 4992, %s17, [#allocation4], 128, 128, 8
    $region9: #{generator_forward.1} parent=1 // pred_fallthru
      _
    // Predicated region
    $region10: #{generator_forward.1} parent=1 // pred_check
      _
    $region11: #{generator_forward.1} parent=1 // pred_check_branch
      %24 = sbr.rel (0) target = $region13
    $region12: #{generator_forward.1} parent=1 // pred_region
      %25 = dma.done [#allocation4], 4992
    $region13: #{generator_forward.1} parent=1 // pred_fallthru
      _
    %v26 = vld [vmem:[%s0] sm:$0xff]
    %v27 = vld [vmem:[%s0 + $0x8] sm:$0xff]
    %v28 = vld [vmem:[%s0 + $0x10] sm:$0xff]
    %v29 = vld [vmem:[%s0 + $0x18] sm:$0xff]
    %v30 = vld [vmem:[%s0 + $0x20] sm:$0xff]
    %v31 = vld [vmem:[%s0 + $0x28] sm:$0xff]
    %v32 = vld [vmem:[%s0 + $0x30] sm:$0xff]
    %v33 = vld [vmem:[%s0 + $0x38] sm:$0xff]
    %v34 = vld [vmem:[#allocation3] sm:$0xff]
    %v35 = vld [vmem:[#allocation3 + $0x8] sm:$0xff]
    %v36 = vld [vmem:[#allocation3 + $0x10] sm:$0xff]
    %v37 = vld [vmem:[#allocation3 + $0x18] sm:$0xff]
    %v38 = vld [vmem:[#allocation3 + $0x20] sm:$0xff]
    %v39 = vld [vmem:[#allocation3 + $0x28] sm:$0xff]
    %v40 = vld [vmem:[#allocation3 + $0x30] sm:$0xff]
    %v41 = vld [vmem:[#allocation3 + $0x38] sm:$0xff]
    %v42 = vld [vmem:[#allocation3 + $0x40] sm:$0xff]
    %v43 = vld [vmem:[#allocation3 + $0x48] sm:$0xff]
    %v44 = vld [vmem:[#allocation3 + $0x50] sm:$0xff]
    %v45 = vld [vmem:[#allocation3 + $0x58] sm:$0xff]
    %v46 = vld [vmem:[#allocation3 + $0x60] sm:$0xff]
    %v47 = vld [vmem:[#allocation3 + $0x68] sm:$0xff]
    %v48 = vld [vmem:[#allocation3 + $0x70] sm:$0xff]
    %v49 = vld [vmem:[#allocation3 + $0x78] sm:$0xff]
    %v50 = vld [vmem:[#allocation3 + $0x80] sm:$0xff]
    %v51 = vld [vmem:[#allocation3 + $0x110] sm:$0xff]
    %v52 = vld [vmem:[#allocation3 + $0x120] sm:$0xff]
    %v53 = vld [vmem:[#allocation3 + $0x130] sm:$0x1]
    %v54 = vld [vmem:[#allocation3 + $0x131] sm:$0x1]
    %v55 = vld [vmem:[#allocation3 + $0x134] sm:$0x1]
    %57 = vset.pattern.permute.xlu0 0
    %58 = vperm.xlu0 %57, %v27
    %v59 = vpop.permute.xlu0 %58
    %62 = vset.pattern.permute.xlu0 0
    %63 = vperm.xlu0 %62, %v28
    %v64 = vpop.permute.xlu0 %63
    %67 = vset.pattern.permute.xlu0 0
    %68 = vperm.xlu0 %67, %v29
    %v69 = vpop.permute.xlu0 %68
    %72 = vset.pattern.permute.xlu0 0
    %73 = vperm.xlu0 %72, %v30
    %v74 = vpop.permute.xlu0 %73
    %77 = vset.pattern.permute.xlu0 0
    %78 = vperm.xlu0 %77, %v31
    %v79 = vpop.permute.xlu0 %78
    %82 = vset.pattern.permute.xlu0 0
    %83 = vperm.xlu0 %82, %v32
    %v84 = vpop.permute.xlu0 %83
    %87 = vset.pattern.permute.xlu0 0
    %88 = vperm.xlu0 %87, %v33
    %v89 = vpop.permute.xlu0 %88
    %v91 = vlaneseq
    %v92 = vshrl.u32 %v91, 7
    %v93 = vsub.s32 0, %v92
    %v94 = vrot.slane %v53, %v93
    %v95 = vmul.f32 %v59, %v94
    %v96 = vmul.f32 %v64, %v94
    %v97 = vmul.f32 %v69, %v94
    %v98 = vmul.f32 %v74, %v94
    %v99 = vmul.f32 %v79, %v94
    %v100 = vmul.f32 %v84, %v94
    %v101 = vmul.f32 %v89, %v94
    %v102 = vlaneseq
    %v103 = vshrl.u32 %v102, 7
    %v104 = vsub.s32 0, %v103
    %v105 = vrot.slane %v54, %v104
    %v106 = vadd.f32 %v95, %v105
    %v107 = vadd.f32 %v96, %v105
    %v108 = vadd.f32 %v97, %v105
    %v109 = vadd.f32 %v98, %v105
    %v110 = vadd.f32 %v99, %v105
    %v111 = vadd.f32 %v100, %v105
    %v112 = vadd.f32 %v101, %v105
    %v113 = vmax.f32 %v106, 0.0
    %v114 = vmax.f32 %v107, 0.0
    %v115 = vmax.f32 %v108, 0.0
    %v116 = vmax.f32 %v109, 0.0
    %v117 = vmax.f32 %v110, 0.0
    %v118 = vmax.f32 %v111, 0.0
    %v119 = vmax.f32 %v112, 0.0
    %vm120 = vcmask 64512
    %v122 = vsel %vm120, %v26, 0
    %124 = vmatprep.subr.mxu0 0.0
    %125 = vmatpush1.msra.mxu0 %v42
    %126 = vmatprep.subr.mxu0 0.0
    %127 = vmatpush1.msra.mxu0 0.0
    %128 = vmatprep.subr.mxu0 0.0
    %129 = vmatpush1.msra.mxu0 0.0
    %130 = vmatprep.subr.mxu0 0.0
    %131 = vmatpush1.msra.mxu0 0.0
    %132 = vmatprep.subr.mxu0 0.0
    %133 = vmatpush1.msra.mxu0 0.0
    %134 = vmatprep.subr.mxu0 0.0
    %135 = vmatpush1.msra.mxu0 0.0
    %136 = vmatprep.subr.mxu0 0.0
    %137 = vmatpush1.msra.mxu0 0.0
    %138 = vmatprep.subr.mxu0 0.0
    %139 = vmatpush1.msra.mxu0 0.0
    %140 = vmatprep.subr.mxu0 0.0
    %141 = vmatpush1.msra.mxu0 0.0
    %142 = vmatprep.subr.mxu0 0.0
    %143 = vmatpush1.msra.mxu0 0.0
    %144 = vmatprep.subr.mxu0 0.0
    %145 = vmatpush1.msra.mxu0 0.0
    %146 = vmatprep.subr.mxu0 0.0
    %147 = vmatpush1.msra.mxu0 0.0
    %148 = vmatprep.subr.mxu0 0.0
    %149 = vmatpush1.msra.mxu0 0.0
    %150 = vmatprep.subr.mxu0 0.0
    %151 = vmatpush1.msra.mxu0 0.0
    %152 = vmatprep.subr.mxu0 0.0
    %153 = vmatpush1.msra.mxu0 0.0
    %154 = vmatprep.subr.mxu0 0.0
    %155 = vmatpush1.msra.mxu0 0.0
    %156 = vmatprep.subr.mxu0 0.0
    %157 = vmatpush1.msra.mxu0 0.0
    %158 = vmatprep.subr.mxu0 0.0
    %159 = vmatpush1.msra.mxu0 0.0
    %160 = vmatprep.subr.mxu0 0.0
    %161 = vmatpush1.msra.mxu0 0.0
    %162 = vmatprep.subr.mxu0 0.0
    %163 = vmatpush1.msra.mxu0 0.0
    %164 = vmatprep.subr.mxu0 0.0
    %165 = vmatpush1.msra.mxu0 0.0
    %166 = vmatprep.subr.mxu0 0.0
    %167 = vmatpush1.msra.mxu0 0.0
    %168 = vmatprep.subr.mxu0 0.0
    %169 = vmatpush1.msra.mxu0 0.0
    %170 = vmatprep.subr.mxu0 0.0
    %171 = vmatpush1.msra.mxu0 0.0
    %172 = vmatprep.subr.mxu0 0.0
    %173 = vmatpush1.msra.mxu0 0.0
    %174 = vmatprep.subr.mxu0 0.0
    %175 = vmatpush1.msra.mxu0 0.0
    %176 = vmatprep.subr.mxu0 0.0
    %177 = vmatpush1.msra.mxu0 0.0
    %178 = vmatprep.subr.mxu0 0.0
    %179 = vmatpush1.msra.mxu0 0.0
    %180 = vmatprep.subr.mxu0 0.0
    %181 = vmatpush1.msra.mxu0 0.0
    %182 = vmatprep.subr.mxu0 0.0
    %183 = vmatpush1.msra.mxu0 0.0
    %184 = vmatprep.subr.mxu0 0.0
    %185 = vmatpush1.msra.mxu0 0.0
    %186 = vmatprep.subr.mxu0 0.0
    %187 = vmatpush1.msra.mxu0 0.0
    %188 = vmatprep.mubr.f32.mxu0 0.0
    %189 = vmatmul.mubr.f32.gmra.mrb[0].mxu0 %v122
    %v190 = vpop.f32.mrb[0].mxu0
    %v191 = vadd.f32 0.0, %v190
    %v192 = vpop.f32.mrb[0].mxu0
    %193 = vdwg.mxu0
    %v195 = vsel %vm120, %v34, 0
    %v198 = vsel %vm120, %v35, 0
    %v201 = vsel %vm120, %v36, 0
    %v204 = vsel %vm120, %v37, 0
    %v207 = vsel %vm120, %v38, 0
    %v210 = vsel %vm120, %v39, 0
    %v213 = vsel %vm120, %v40, 0
    %215 = vmatprep.subr.mxu0 0.0
    %216 = vmatpush1.msra.mxu0 %v191
    %217 = vmatprep.subr.mxu0 0.0
    %218 = vmatpush1.msra.mxu0 0.0
    %219 = vmatprep.subr.mxu0 0.0
    %220 = vmatpush1.msra.mxu0 0.0
    %221 = vmatprep.subr.mxu0 0.0
    %222 = vmatpush1.msra.mxu0 0.0
    %223 = vmatprep.subr.mxu0 0.0
    %224 = vmatpush1.msra.mxu0 0.0
    %225 = vmatprep.subr.mxu0 0.0
    %226 = vmatpush1.msra.mxu0 0.0
    %227 = vmatprep.subr.mxu0 0.0
    %228 = vmatpush1.msra.mxu0 0.0
    %229 = vmatprep.subr.mxu0 0.0
    %230 = vmatpush1.msra.mxu0 0.0
    %231 = vmatprep.subr.mxu0 0.0
    %232 = vmatpush1.msra.mxu0 0.0
    %233 = vmatprep.subr.mxu0 0.0
    %234 = vmatpush1.msra.mxu0 0.0
    %235 = vmatprep.subr.mxu0 0.0
    %236 = vmatpush1.msra.mxu0 0.0
    %237 = vmatprep.subr.mxu0 0.0
    %238 = vmatpush1.msra.mxu0 0.0
    %239 = vmatprep.subr.mxu0 0.0
    %240 = vmatpush1.msra.mxu0 0.0
    %241 = vmatprep.subr.mxu0 0.0
    %242 = vmatpush1.msra.mxu0 0.0
    %243 = vmatprep.subr.mxu0 0.0
    %244 = vmatpush1.msra.mxu0 0.0
    %245 = vmatprep.subr.mxu0 0.0
    %246 = vmatpush1.msra.mxu0 0.0
    %247 = vmatprep.subr.mxu0 0.0
    %248 = vmatpush1.msra.mxu0 0.0
    %249 = vmatprep.subr.mxu0 0.0
    %250 = vmatpush1.msra.mxu0 0.0
    %251 = vmatprep.subr.mxu0 0.0
    %252 = vmatpush1.msra.mxu0 0.0
    %253 = vmatprep.subr.mxu0 0.0
    %254 = vmatpush1.msra.mxu0 0.0
    %255 = vmatprep.subr.mxu0 0.0
    %256 = vmatpush1.msra.mxu0 0.0
    %257 = vmatprep.subr.mxu0 0.0
    %258 = vmatpush1.msra.mxu0 0.0
    %259 = vmatprep.subr.mxu0 0.0
    %260 = vmatpush1.msra.mxu0 0.0
    %261 = vmatprep.subr.mxu0 0.0
    %262 = vmatpush1.msra.mxu0 0.0
    %263 = vmatprep.subr.mxu0 0.0
    %264 = vmatpush1.msra.mxu0 0.0
    %265 = vmatprep.subr.mxu0 0.0
    %266 = vmatpush1.msra.mxu0 0.0
    %267 = vmatprep.subr.mxu0 0.0
    %268 = vmatpush1.msra.mxu0 0.0
    %269 = vmatprep.subr.mxu0 0.0
    %270 = vmatpush1.msra.mxu0 0.0
    %271 = vmatprep.subr.mxu0 0.0
    %272 = vmatpush1.msra.mxu0 0.0
    %273 = vmatprep.subr.mxu0 0.0
    %274 = vmatpush1.msra.mxu0 0.0
    %275 = vmatprep.subr.mxu0 0.0
    %276 = vmatpush1.msra.mxu0 0.0
    %277 = vmatprep.subr.mxu0 0.0
    %278 = vmatpush1.msra.mxu0 0.0
    %279 = vmatprep.mubr.f32.mxu0 0.0
    %280 = vmatmul.mubr.f32.gmra.mrb[0].mxu0 %v195
    %v281 = vpop.f32.mrb[0].mxu0
    %v282 = vadd.f32 0.0, %v281
    %v283 = vpop.f32.mrb[0].mxu0
    %284 = vmatprep.mubr.f32.mxu0 0.0
    %285 = vmatmul.mubr.f32.gmra.mrb[0].mxu0 %v198
    %v286 = vpop.f32.mrb[0].mxu0
    %v287 = vadd.f32 0.0, %v286
    %v288 = vpop.f32.mrb[0].mxu0
    %289 = vmatprep.mubr.f32.mxu0 0.0
    %290 = vmatmul.mubr.f32.gmra.mrb[0].mxu0 %v201
    %v291 = vpop.f32.mrb[0].mxu0
    %v292 = vadd.f32 0.0, %v291
    %v293 = vpop.f32.mrb[0].mxu0
    %294 = vmatprep.mubr.f32.mxu0 0.0
    %295 = vmatmul.mubr.f32.gmra.mrb[0].mxu0 %v204
    %v296 = vpop.f32.mrb[0].mxu0
    %v297 = vadd.f32 0.0, %v296
    %v298 = vpop.f32.mrb[0].mxu0
    %299 = vmatprep.mubr.f32.mxu0 0.0
    %300 = vmatmul.mubr.f32.gmra.mrb[0].mxu0 %v207
    %v301 = vpop.f32.mrb[0].mxu0
    %v302 = vadd.f32 0.0, %v301
    %v303 = vpop.f32.mrb[0].mxu0
    %304 = vmatprep.mubr.f32.mxu0 0.0
    %305 = vmatmul.mubr.f32.gmra.mrb[0].mxu0 %v210
    %v306 = vpop.f32.mrb[0].mxu0
    %v307 = vadd.f32 0.0, %v306
    %v308 = vpop.f32.mrb[0].mxu0
    %309 = vmatprep.mubr.f32.mxu0 0.0
    %310 = vmatmul.mubr.f32.gmra.mrb[0].mxu0 %v213
    %v311 = vpop.f32.mrb[0].mxu0
    %v312 = vadd.f32 0.0, %v311
    %v313 = vpop.f32.mrb[0].mxu0
    %314 = vdwg.mxu0
    %v315 = vmul.f32 %v282, %v113
    %v316 = vmul.f32 %v287, %v114
    %v317 = vmul.f32 %v292, %v115
    %v318 = vmul.f32 %v297, %v116
    %v319 = vmul.f32 %v302, %v117
    %v320 = vmul.f32 %v307, %v118
    %v321 = vmul.f32 %v312, %v119
    %vm322 = vcmask 457728
    %v324 = vsel %vm322, %v41, 0
    %326 = vmatprep.subr.mxu0 0.0
    %327 = vmatpush1.msra.mxu0 %v315
    %328 = vmatprep.subr.mxu0 0.0
    %329 = vmatpush1.msra.mxu0 %v316
    %330 = vmatprep.subr.mxu0 0.0
    %331 = vmatpush1.msra.mxu0 %v317
    %332 = vmatprep.subr.mxu0 0.0
    %333 = vmatpush1.msra.mxu0 %v318
    %334 = vmatprep.subr.mxu0 0.0
    %335 = vmatpush1.msra.mxu0 %v319
    %336 = vmatprep.subr.mxu0 0.0
    %337 = vmatpush1.msra.mxu0 %v320
    %338 = vmatprep.subr.mxu0 0.0
    %339 = vmatpush1.msra.mxu0 %v321
    %340 = vmatprep.subr.mxu0 0.0
    %341 = vmatpush1.msra.mxu0 0.0
    %342 = vmatprep.subr.mxu0 0.0
    %343 = vmatpush1.msra.mxu0 0.0
    %344 = vmatprep.subr.mxu0 0.0
    %345 = vmatpush1.msra.mxu0 0.0
    %346 = vmatprep.subr.mxu0 0.0
    %347 = vmatpush1.msra.mxu0 0.0
    %348 = vmatprep.subr.mxu0 0.0
    %349 = vmatpush1.msra.mxu0 0.0
    %350 = vmatprep.subr.mxu0 0.0
    %351 = vmatpush1.msra.mxu0 0.0
    %352 = vmatprep.subr.mxu0 0.0
    %353 = vmatpush1.msra.mxu0 0.0
    %354 = vmatprep.subr.mxu0 0.0
    %355 = vmatpush1.msra.mxu0 0.0
    %356 = vmatprep.subr.mxu0 0.0
    %357 = vmatpush1.msra.mxu0 0.0
    %358 = vmatprep.subr.mxu0 0.0
    %359 = vmatpush1.msra.mxu0 0.0
    %360 = vmatprep.subr.mxu0 0.0
    %361 = vmatpush1.msra.mxu0 0.0
    %362 = vmatprep.subr.mxu0 0.0
    %363 = vmatpush1.msra.mxu0 0.0
    %364 = vmatprep.subr.mxu0 0.0
    %365 = vmatpush1.msra.mxu0 0.0
    %366 = vmatprep.subr.mxu0 0.0
    %367 = vmatpush1.msra.mxu0 0.0
    %368 = vmatprep.subr.mxu0 0.0
    %369 = vmatpush1.msra.mxu0 0.0
    %370 = vmatprep.subr.mxu0 0.0
    %371 = vmatpush1.msra.mxu0 0.0
    %372 = vmatprep.subr.mxu0 0.0
    %373 = vmatpush1.msra.mxu0 0.0
    %374 = vmatprep.subr.mxu0 0.0
    %375 = vmatpush1.msra.mxu0 0.0
    %376 = vmatprep.subr.mxu0 0.0
    %377 = vmatpush1.msra.mxu0 0.0
    %378 = vmatprep.subr.mxu0 0.0
    %379 = vmatpush1.msra.mxu0 0.0
    %380 = vmatprep.subr.mxu0 0.0
    %381 = vmatpush1.msra.mxu0 0.0
    %382 = vmatprep.subr.mxu0 0.0
    %383 = vmatpush1.msra.mxu0 0.0
    %384 = vmatprep.subr.mxu0 0.0
    %385 = vmatpush1.msra.mxu0 0.0
    %386 = vmatprep.subr.mxu0 0.0
    %387 = vmatpush1.msra.mxu0 0.0
    %388 = vmatprep.subr.mxu0 0.0
    %389 = vmatpush1.msra.mxu0 0.0
    %390 = vmatprep.mubr.f32.mxu0 0.0
    %391 = vmatmul.mubr.f32.gmra.mrb[0].mxu0 %v324
    %v392 = vpop.f32.mrb[0].mxu0
    %v393 = vadd.f32 0.0, %v392
    %v394 = vpop.f32.mrb[0].mxu0
    %395 = vdwg.mxu0
    %vm396 = vcmask 523264
    %v398 = vsel %vm396, %v393, 0
    %400 = vmatprep.subr.mxu0 0.0
    %401 = vmatpush1.msra.mxu0 %v43
    %402 = vmatprep.subr.mxu0 0.0
    %403 = vmatpush1.msra.mxu0 %v44
    %404 = vmatprep.subr.mxu0 0.0
    %405 = vmatpush1.msra.mxu0 %v45
    %406 = vmatprep.subr.mxu0 0.0
    %407 = vmatpush1.msra.mxu0 %v46
    %408 = vmatprep.subr.mxu0 0.0
    %409 = vmatpush1.msra.mxu0 %v47
    %410 = vmatprep.subr.mxu0 0.0
    %411 = vmatpush1.msra.mxu0 %v48
    %412 = vmatprep.subr.mxu0 0.0
    %413 = vmatpush1.msra.mxu0 %v49
    %414 = vmatprep.subr.mxu0 0.0
    %415 = vmatpush1.msra.mxu0 %v50
    %416 = vmatprep.subr.mxu0 0.0
    %417 = vmatpush1.msra.mxu0 0.0
    %418 = vmatprep.subr.mxu0 0.0
    %419 = vmatpush1.msra.mxu0 0.0
    %420 = vmatprep.subr.mxu0 0.0
    %421 = vmatpush1.msra.mxu0 0.0
    %422 = vmatprep.subr.mxu0 0.0
    %423 = vmatpush1.msra.mxu0 0.0
    %424 = vmatprep.subr.mxu0 0.0
    %425 = vmatpush1.msra.mxu0 0.0
    %426 = vmatprep.subr.mxu0 0.0
    %427 = vmatpush1.msra.mxu0 0.0
    %428 = vmatprep.subr.mxu0 0.0
    %429 = vmatpush1.msra.mxu0 0.0
    %430 = vmatprep.subr.mxu0 0.0
    %431 = vmatpush1.msra.mxu0 0.0
    %432 = vmatprep.subr.mxu0 0.0
    %433 = vmatpush1.msra.mxu0 0.0
    %434 = vmatprep.subr.mxu0 0.0
    %435 = vmatpush1.msra.mxu0 0.0
    %436 = vmatprep.subr.mxu0 0.0
    %437 = vmatpush1.msra.mxu0 0.0
    %438 = vmatprep.subr.mxu0 0.0
    %439 = vmatpush1.msra.mxu0 0.0
    %440 = vmatprep.subr.mxu0 0.0
    %441 = vmatpush1.msra.mxu0 0.0
    %442 = vmatprep.subr.mxu0 0.0
    %443 = vmatpush1.msra.mxu0 0.0
    %444 = vmatprep.subr.mxu0 0.0
    %445 = vmatpush1.msra.mxu0 0.0
    %446 = vmatprep.subr.mxu0 0.0
    %447 = vmatpush1.msra.mxu0 0.0
    %448 = vmatprep.subr.mxu0 0.0
    %449 = vmatpush1.msra.mxu0 0.0
    %450 = vmatprep.subr.mxu0 0.0
    %451 = vmatpush1.msra.mxu0 0.0
    %452 = vmatprep.subr.mxu0 0.0
    %453 = vmatpush1.msra.mxu0 0.0
    %454 = vmatprep.subr.mxu0 0.0
    %455 = vmatpush1.msra.mxu0 0.0
    %456 = vmatprep.subr.mxu0 0.0
    %457 = vmatpush1.msra.mxu0 0.0
    %458 = vmatprep.subr.mxu0 0.0
    %459 = vmatpush1.msra.mxu0 0.0
    %460 = vmatprep.subr.mxu0 0.0
    %461 = vmatpush1.msra.mxu0 0.0
    %462 = vmatprep.subr.mxu0 0.0
    %463 = vmatpush1.msra.mxu0 0.0
    %464 = vmatprep.mubr.f32.mxu0 0.0
    %465 = vmatmul.mubr.f32.gmra.mrb[0].mxu0 %v398
    %v466 = vpop.f32.mrb[0].mxu0
    %v467 = vadd.f32 0.0, %v466
    %v468 = vpop.f32.mrb[0].mxu0
    %469 = vdwg.mxu0
    %470 = vmatprep.subr.mxu0 0.0
    %471 = vmatpush1.msra.mxu0 %v51
    %472 = vmatprep.subr.mxu0 0.0
    %473 = vmatpush1.msra.mxu0 0.0
    %474 = vmatprep.subr.mxu0 0.0
    %475 = vmatpush1.msra.mxu0 0.0
    %476 = vmatprep.subr.mxu0 0.0
    %477 = vmatpush1.msra.mxu0 0.0
    %478 = vmatprep.subr.mxu0 0.0
    %479 = vmatpush1.msra.mxu0 0.0
    %480 = vmatprep.subr.mxu0 0.0
    %481 = vmatpush1.msra.mxu0 0.0
    %482 = vmatprep.subr.mxu0 0.0
    %483 = vmatpush1.msra.mxu0 0.0
    %484 = vmatprep.subr.mxu0 0.0
    %485 = vmatpush1.msra.mxu0 0.0
    %486 = vmatprep.subr.mxu0 0.0
    %487 = vmatpush1.msra.mxu0 0.0
    %488 = vmatprep.subr.mxu0 0.0
    %489 = vmatpush1.msra.mxu0 0.0
    %490 = vmatprep.subr.mxu0 0.0
    %491 = vmatpush1.msra.mxu0 0.0
    %492 = vmatprep.subr.mxu0 0.0
    %493 = vmatpush1.msra.mxu0 0.0
    %494 = vmatprep.subr.mxu0 0.0
    %495 = vmatpush1.msra.mxu0 0.0
    %496 = vmatprep.subr.mxu0 0.0
    %497 = vmatpush1.msra.mxu0 0.0
    %498 = vmatprep.subr.mxu0 0.0
    %499 = vmatpush1.msra.mxu0 0.0
    %500 = vmatprep.subr.mxu0 0.0
    %501 = vmatpush1.msra.mxu0 0.0
    %502 = vmatprep.subr.mxu0 0.0
    %503 = vmatpush1.msra.mxu0 0.0
    %504 = vmatprep.subr.mxu0 0.0
    %505 = vmatpush1.msra.mxu0 0.0
    %506 = vmatprep.subr.mxu0 0.0
    %507 = vmatpush1.msra.mxu0 0.0
    %508 = vmatprep.subr.mxu0 0.0
    %509 = vmatpush1.msra.mxu0 0.0
    %510 = vmatprep.subr.mxu0 0.0
    %511 = vmatpush1.msra.mxu0 0.0
    %512 = vmatprep.subr.mxu0 0.0
    %513 = vmatpush1.msra.mxu0 0.0
    %514 = vmatprep.subr.mxu0 0.0
    %515 = vmatpush1.msra.mxu0 0.0
    %516 = vmatprep.subr.mxu0 0.0
    %517 = vmatpush1.msra.mxu0 0.0
    %518 = vmatprep.subr.mxu0 0.0
    %519 = vmatpush1.msra.mxu0 0.0
    %520 = vmatprep.subr.mxu0 0.0
    %521 = vmatpush1.msra.mxu0 0.0
    %522 = vmatprep.subr.mxu0 0.0
    %523 = vmatpush1.msra.mxu0 0.0
    %524 = vmatprep.subr.mxu0 0.0
    %525 = vmatpush1.msra.mxu0 0.0
    %526 = vmatprep.subr.mxu0 0.0
    %527 = vmatpush1.msra.mxu0 0.0
    %528 = vmatprep.subr.mxu0 0.0
    %529 = vmatpush1.msra.mxu0 0.0
    %530 = vmatprep.subr.mxu0 0.0
    %531 = vmatpush1.msra.mxu0 0.0
    %532 = vmatprep.subr.mxu0 0.0
    %533 = vmatpush1.msra.mxu0 0.0
    %534 = vmatprep.mubr.f32.mxu0 0.0
    %535 = vmatmul.mubr.f32.gmra.mrb[0].mxu0 %v122
    %v536 = vpop.f32.mrb[0].mxu0
    %v537 = vadd.f32 0.0, %v536
    %v538 = vpop.f32.mrb[0].mxu0
    %539 = vdwg.mxu0
    %v540 = vmul.f32 %v467, %v52
    %v541 = vadd.f32 %v540, %v537
    %v542 = vlaneseq
    %v543 = vshrl.u32 %v542, 7
    %v544 = vsub.s32 0, %v543
    %v545 = vrot.slane %v55, %v544
    %v546 = vadd.f32 %v541, %v545
    %v547 = vxor.u32 %v546, 2147483648
    %v548 = vmul.f32 %v547, 1.442695
    %v549 = vpow.pop %v548
    %v550 = vadd.f32 %v549, 1.0
    %v551 = vrcp.pop %v550
    %v552 = vmul.f32 1.0, %v551
    %v553 = vld [vmem:[#allocation3 + $0x88] sm:$0xff]
    %v554 = vld [vmem:[#allocation3 + $0x90] sm:$0xff]
    %v555 = vld [vmem:[#allocation3 + $0x98] sm:$0xff]
    %v556 = vld [vmem:[#allocation3 + $0xa0] sm:$0xff]
    %v557 = vld [vmem:[#allocation3 + $0xa8] sm:$0xff]
    %v558 = vld [vmem:[#allocation3 + $0xb0] sm:$0xff]
    %v559 = vld [vmem:[#allocation3 + $0xb8] sm:$0xff]
    %v560 = vld [vmem:[#allocation3 + $0xc0] sm:$0xff]
    %v561 = vld [vmem:[#allocation3 + $0xc8] sm:$0xff]
    %v562 = vld [vmem:[#allocation3 + $0xd0] sm:$0xff]
    %v563 = vld [vmem:[#allocation3 + $0xd8] sm:$0xff]
    %v564 = vld [vmem:[#allocation3 + $0xe0] sm:$0xff]
    %v565 = vld [vmem:[#allocation3 + $0xe8] sm:$0xff]
    %v566 = vld [vmem:[#allocation3 + $0xf0] sm:$0xff]
    %v567 = vld [vmem:[#allocation3 + $0xf8] sm:$0xff]
    %v568 = vld [vmem:[#allocation3 + $0x100] sm:$0xff]
    %v569 = vld [vmem:[#allocation3 + $0x108] sm:$0xff]
    %v570 = vld [vmem:[#allocation3 + $0x118] sm:$0xff]
    %v571 = vld [vmem:[#allocation3 + $0x128] sm:$0xff]
    %v572 = vld [vmem:[#allocation3 + $0x132] sm:$0x1]
    %v573 = vld [vmem:[#allocation3 + $0x133] sm:$0x1]
    %v574 = vld [vmem:[#allocation3 + $0x135] sm:$0x1]
    %v575 = vlaneseq
    %v576 = vshrl.u32 %v575, 7
    %v577 = vsub.s32 0, %v576
    %v578 = vrot.slane %v572, %v577
    %v579 = vmul.f32 %v59, %v578
    %v580 = vmul.f32 %v64, %v578
    %v581 = vmul.f32 %v69, %v578
    %v582 = vmul.f32 %v74, %v578
    %v583 = vmul.f32 %v79, %v578
    %v584 = vmul.f32 %v84, %v578
    %v585 = vmul.f32 %v89, %v578
    %v586 = vlaneseq
    %v587 = vshrl.u32 %v586, 7
    %v588 = vsub.s32 0, %v587
    %v589 = vrot.slane %v573, %v588
    %v590 = vadd.f32 %v579, %v589
    %v591 = vadd.f32 %v580, %v589
    %v592 = vadd.f32 %v581, %v589
    %v593 = vadd.f32 %v582, %v589
    %v594 = vadd.f32 %v583, %v589
    %v595 = vadd.f32 %v584, %v589
    %v596 = vadd.f32 %v585, %v589
    %v597 = vmax.f32 %v590, 0.0
    %v598 = vmax.f32 %v591, 0.0
    %v599 = vmax.f32 %v592, 0.0
    %v600 = vmax.f32 %v593, 0.0
    %v601 = vmax.f32 %v594, 0.0
    %v602 = vmax.f32 %v595, 0.0
    %v603 = vmax.f32 %v596, 0.0
    %v605 = vsel %vm120, %v552, 0
    %607 = vmatprep.subr.mxu0 0.0
    %608 = vmatpush1.msra.mxu0 %v553
    %609 = vmatprep.subr.mxu0 0.0
    %610 = vmatpush1.msra.mxu0 0.0
    %611 = vmatprep.subr.mxu0 0.0
    %612 = vmatpush1.msra.mxu0 0.0
    %613 = vmatprep.subr.mxu0 0.0
    %614 = vmatpush1.msra.mxu0 0.0
    %615 = vmatprep.subr.mxu0 0.0
    %616 = vmatpush1.msra.mxu0 0.0
    %617 = vmatprep.subr.mxu0 0.0
    %618 = vmatpush1.msra.mxu0 0.0
    %619 = vmatprep.subr.mxu0 0.0
    %620 = vmatpush1.msra.mxu0 0.0
    %621 = vmatprep.subr.mxu0 0.0
    %622 = vmatpush1.msra.mxu0 0.0
    %623 = vmatprep.subr.mxu0 0.0
    %624 = vmatpush1.msra.mxu0 0.0
    %625 = vmatprep.subr.mxu0 0.0
    %626 = vmatpush1.msra.mxu0 0.0
    %627 = vmatprep.subr.mxu0 0.0
    %628 = vmatpush1.msra.mxu0 0.0
    %629 = vmatprep.subr.mxu0 0.0
    %630 = vmatpush1.msra.mxu0 0.0
    %631 = vmatprep.subr.mxu0 0.0
    %632 = vmatpush1.msra.mxu0 0.0
    %633 = vmatprep.subr.mxu0 0.0
    %634 = vmatpush1.msra.mxu0 0.0
    %635 = vmatprep.subr.mxu0 0.0
    %636 = vmatpush1.msra.mxu0 0.0
    %637 = vmatprep.subr.mxu0 0.0
    %638 = vmatpush1.msra.mxu0 0.0
    %639 = vmatprep.subr.mxu0 0.0
    %640 = vmatpush1.msra.mxu0 0.0
    %641 = vmatprep.subr.mxu0 0.0
    %642 = vmatpush1.msra.mxu0 0.0
    %643 = vmatprep.subr.mxu0 0.0
    %644 = vmatpush1.msra.mxu0 0.0
    %645 = vmatprep.subr.mxu0 0.0
    %646 = vmatpush1.msra.mxu0 0.0
    %647 = vmatprep.subr.mxu0 0.0
    %648 = vmatpush1.msra.mxu0 0.0
    %649 = vmatprep.subr.mxu0 0.0
    %650 = vmatpush1.msra.mxu0 0.0
    %651 = vmatprep.subr.mxu0 0.0
    %652 = vmatpush1.msra.mxu0 0.0
    %653 = vmatprep.subr.mxu0 0.0
    %654 = vmatpush1.msra.mxu0 0.0
    %655 = vmatprep.subr.mxu0 0.0
    %656 = vmatpush1.msra.mxu0 0.0
    %657 = vmatprep.subr.mxu0 0.0
    %658 = vmatpush1.msra.mxu0 0.0
    %659 = vmatprep.subr.mxu0 0.0
    %660 = vmatpush1.msra.mxu0 0.0
    %661 = vmatprep.subr.mxu0 0.0
    %662 = vmatpush1.msra.mxu0 0.0
    %663 = vmatprep.subr.mxu0 0.0
    %664 = vmatpush1.msra.mxu0 0.0
    %665 = vmatprep.subr.mxu0 0.0
    %666 = vmatpush1.msra.mxu0 0.0
    %667 = vmatprep.subr.mxu0 0.0
    %668 = vmatpush1.msra.mxu0 0.0
    %669 = vmatprep.subr.mxu0 0.0
    %670 = vmatpush1.msra.mxu0 0.0
    %671 = vmatprep.mubr.f32.mxu0 0.0
    %672 = vmatmul.mubr.f32.gmra.mrb[0].mxu0 %v605
    %v673 = vpop.f32.mrb[0].mxu0
    %v674 = vadd.f32 0.0, %v673
    %v675 = vpop.f32.mrb[0].mxu0
    %676 = vdwg.mxu0
    %677 = vmatprep.subr.mxu0 0.0
    %678 = vmatpush1.msra.mxu0 %v674
    %679 = vmatprep.subr.mxu0 0.0
    %680 = vmatpush1.msra.mxu0 0.0
    %681 = vmatprep.subr.mxu0 0.0
    %682 = vmatpush1.msra.mxu0 0.0
    %683 = vmatprep.subr.mxu0 0.0
    %684 = vmatpush1.msra.mxu0 0.0
    %685 = vmatprep.subr.mxu0 0.0
    %686 = vmatpush1.msra.mxu0 0.0
    %687 = vmatprep.subr.mxu0 0.0
    %688 = vmatpush1.msra.mxu0 0.0
    %689 = vmatprep.subr.mxu0 0.0
    %690 = vmatpush1.msra.mxu0 0.0
    %691 = vmatprep.subr.mxu0 0.0
    %692 = vmatpush1.msra.mxu0 0.0
    %693 = vmatprep.subr.mxu0 0.0
    %694 = vmatpush1.msra.mxu0 0.0
    %695 = vmatprep.subr.mxu0 0.0
    %696 = vmatpush1.msra.mxu0 0.0
    %697 = vmatprep.subr.mxu0 0.0
    %698 = vmatpush1.msra.mxu0 0.0
    %699 = vmatprep.subr.mxu0 0.0
    %700 = vmatpush1.msra.mxu0 0.0
    %701 = vmatprep.subr.mxu0 0.0
    %702 = vmatpush1.msra.mxu0 0.0
    %703 = vmatprep.subr.mxu0 0.0
    %704 = vmatpush1.msra.mxu0 0.0
    %705 = vmatprep.subr.mxu0 0.0
    %706 = vmatpush1.msra.mxu0 0.0
    %707 = vmatprep.subr.mxu0 0.0
    %708 = vmatpush1.msra.mxu0 0.0
    %709 = vmatprep.subr.mxu0 0.0
    %710 = vmatpush1.msra.mxu0 0.0
    %711 = vmatprep.subr.mxu0 0.0
    %712 = vmatpush1.msra.mxu0 0.0
    %713 = vmatprep.subr.mxu0 0.0
    %714 = vmatpush1.msra.mxu0 0.0
    %715 = vmatprep.subr.mxu0 0.0
    %716 = vmatpush1.msra.mxu0 0.0
    %717 = vmatprep.subr.mxu0 0.0
    %718 = vmatpush1.msra.mxu0 0.0
    %719 = vmatprep.subr.mxu0 0.0
    %720 = vmatpush1.msra.mxu0 0.0
    %721 = vmatprep.subr.mxu0 0.0
    %722 = vmatpush1.msra.mxu0 0.0
    %723 = vmatprep.subr.mxu0 0.0
    %724 = vmatpush1.msra.mxu0 0.0
    %725 = vmatprep.subr.mxu0 0.0
    %726 = vmatpush1.msra.mxu0 0.0
    %727 = vmatprep.subr.mxu0 0.0
    %728 = vmatpush1.msra.mxu0 0.0
    %729 = vmatprep.subr.mxu0 0.0
    %730 = vmatpush1.msra.mxu0 0.0
    %731 = vmatprep.subr.mxu0 0.0
    %732 = vmatpush1.msra.mxu0 0.0
    %733 = vmatprep.subr.mxu0 0.0
    %734 = vmatpush1.msra.mxu0 0.0
    %735 = vmatprep.subr.mxu0 0.0
    %736 = vmatpush1.msra.mxu0 0.0
    %737 = vmatprep.subr.mxu0 0.0
    %738 = vmatpush1.msra.mxu0 0.0
    %739 = vmatprep.subr.mxu0 0.0
    %740 = vmatpush1.msra.mxu0 0.0
    %741 = vmatprep.mubr.f32.mxu0 0.0
    %742 = vmatmul.mubr.f32.gmra.mrb[0].mxu0 %v195
    %v743 = vpop.f32.mrb[0].mxu0
    %v744 = vadd.f32 0.0, %v743
    %v745 = vpop.f32.mrb[0].mxu0
    %746 = vmatprep.mubr.f32.mxu0 0.0
    %747 = vmatmul.mubr.f32.gmra.mrb[0].mxu0 %v198
    %v748 = vpop.f32.mrb[0].mxu0
    %v749 = vadd.f32 0.0, %v748
    %v750 = vpop.f32.mrb[0].mxu0
    %751 = vmatprep.mubr.f32.mxu0 0.0
    %752 = vmatmul.mubr.f32.gmra.mrb[0].mxu0 %v201
    %v753 = vpop.f32.mrb[0].mxu0
    %v754 = vadd.f32 0.0, %v753
    %v755 = vpop.f32.mrb[0].mxu0
    %756 = vmatprep.mubr.f32.mxu0 0.0
    %757 = vmatmul.mubr.f32.gmra.mrb[0].mxu0 %v204
    %v758 = vpop.f32.mrb[0].mxu0
    %v759 = vadd.f32 0.0, %v758
    %v760 = vpop.f32.mrb[0].mxu0
    %761 = vmatprep.mubr.f32.mxu0 0.0
    %762 = vmatmul.mubr.f32.gmra.mrb[0].mxu0 %v207
    %v763 = vpop.f32.mrb[0].mxu0
    %v764 = vadd.f32 0.0, %v763
    %v765 = vpop.f32.mrb[0].mxu0
    %766 = vmatprep.mubr.f32.mxu0 0.0
    %767 = vmatmul.mubr.f32.gmra.mrb[0].mxu0 %v210
    %v768 = vpop.f32.mrb[0].mxu0
    %v769 = vadd.f32 0.0, %v768
    %v770 = vpop.f32.mrb[0].mxu0
    %771 = vmatprep.mubr.f32.mxu0 0.0
    %772 = vmatmul.mubr.f32.gmra.mrb[0].mxu0 %v213
    %v773 = vpop.f32.mrb[0].mxu0
    %v774 = vadd.f32 0.0, %v773
    %v775 = vpop.f32.mrb[0].mxu0
    %776 = vdwg.mxu0
    %v777 = vmul.f32 %v744, %v597
    %v778 = vmul.f32 %v749, %v598
    %v779 = vmul.f32 %v754, %v599
    %v780 = vmul.f32 %v759, %v600
    %v781 = vmul.f32 %v764, %v601
    %v782 = vmul.f32 %v769, %v602
    %v783 = vmul.f32 %v774, %v603
    %784 = vmatprep.subr.mxu0 0.0
    %785 = vmatpush1.msra.mxu0 %v777
    %786 = vmatprep.subr.mxu0 0.0
    %787 = vmatpush1.msra.mxu0 %v778
    %788 = vmatprep.subr.mxu0 0.0
    %789 = vmatpush1.msra.mxu0 %v779
    %790 = vmatprep.subr.mxu0 0.0
    %791 = vmatpush1.msra.mxu0 %v780
    %792 = vmatprep.subr.mxu0 0.0
    %793 = vmatpush1.msra.mxu0 %v781
    %794 = vmatprep.subr.mxu0 0.0
    %795 = vmatpush1.msra.mxu0 %v782
    %796 = vmatprep.subr.mxu0 0.0
    %797 = vmatpush1.msra.mxu0 %v783
    %798 = vmatprep.subr.mxu0 0.0
    %799 = vmatpush1.msra.mxu0 0.0
    %800 = vmatprep.subr.mxu0 0.0
    %801 = vmatpush1.msra.mxu0 0.0
    %802 = vmatprep.subr.mxu0 0.0
    %803 = vmatpush1.msra.mxu0 0.0
    %804 = vmatprep.subr.mxu0 0.0
    %805 = vmatpush1.msra.mxu0 0.0
    %806 = vmatprep.subr.mxu0 0.0
    %807 = vmatpush1.msra.mxu0 0.0
    %808 = vmatprep.subr.mxu0 0.0
    %809 = vmatpush1.msra.mxu0 0.0
    %810 = vmatprep.subr.mxu0 0.0
    %811 = vmatpush1.msra.mxu0 0.0
    %812 = vmatprep.subr.mxu0 0.0
    %813 = vmatpush1.msra.mxu0 0.0
    %814 = vmatprep.subr.mxu0 0.0
    %815 = vmatpush1.msra.mxu0 0.0
    %816 = vmatprep.subr.mxu0 0.0
    %817 = vmatpush1.msra.mxu0 0.0
    %818 = vmatprep.subr.mxu0 0.0
    %819 = vmatpush1.msra.mxu0 0.0
    %820 = vmatprep.subr.mxu0 0.0
    %821 = vmatpush1.msra.mxu0 0.0
    %822 = vmatprep.subr.mxu0 0.0
    %823 = vmatpush1.msra.mxu0 0.0
    %824 = vmatprep.subr.mxu0 0.0
    %825 = vmatpush1.msra.mxu0 0.0
    %826 = vmatprep.subr.mxu0 0.0
    %827 = vmatpush1.msra.mxu0 0.0
    %828 = vmatprep.subr.mxu0 0.0
    %829 = vmatpush1.msra.mxu0 0.0
    %830 = vmatprep.subr.mxu0 0.0
    %831 = vmatpush1.msra.mxu0 0.0
    %832 = vmatprep.subr.mxu0 0.0
    %833 = vmatpush1.msra.mxu0 0.0
    %834 = vmatprep.subr.mxu0 0.0
    %835 = vmatpush1.msra.mxu0 0.0
    %836 = vmatprep.subr.mxu0 0.0
    %837 = vmatpush1.msra.mxu0 0.0
    %838 = vmatprep.subr.mxu0 0.0
    %839 = vmatpush1.msra.mxu0 0.0
    %840 = vmatprep.subr.mxu0 0.0
    %841 = vmatpush1.msra.mxu0 0.0
    %842 = vmatprep.subr.mxu0 0.0
    %843 = vmatpush1.msra.mxu0 0.0
    %844 = vmatprep.subr.mxu0 0.0
    %845 = vmatpush1.msra.mxu0 0.0
    %846 = vmatprep.subr.mxu0 0.0
    %847 = vmatpush1.msra.mxu0 0.0
    %848 = vmatprep.mubr.f32.mxu0 0.0
    %849 = vmatmul.mubr.f32.gmra.mrb[0].mxu0 %v324
    %v850 = vpop.f32.mrb[0].mxu0
    %v851 = vadd.f32 0.0, %v850
    %v852 = vpop.f32.mrb[0].mxu0
    %853 = vdwg.mxu0
    %854 = vmatprep.subr.mxu0 0.0
    %855 = vmatpush1.msra.mxu0 %v554
    %856 = vmatprep.subr.mxu0 0.0
    %857 = vmatpush1.msra.mxu0 %v555
    %858 = vmatprep.subr.mxu0 0.0
    %859 = vmatpush1.msra.mxu0 %v556
    %860 = vmatprep.subr.mxu0 0.0
    %861 = vmatpush1.msra.mxu0 %v557
    %862 = vmatprep.subr.mxu0 0.0
    %863 = vmatpush1.msra.mxu0 %v558
    %864 = vmatprep.subr.mxu0 0.0
    %865 = vmatpush1.msra.mxu0 %v559
    %866 = vmatprep.subr.mxu0 0.0
    %867 = vmatpush1.msra.mxu0 %v560
    %868 = vmatprep.subr.mxu0 0.0
    %869 = vmatpush1.msra.mxu0 %v561
    %870 = vmatprep.subr.mxu0 0.0
    %871 = vmatpush1.msra.mxu0 %v562
    %872 = vmatprep.subr.mxu0 0.0
    %873 = vmatpush1.msra.mxu0 %v563
    %874 = vmatprep.subr.mxu0 0.0
    %875 = vmatpush1.msra.mxu0 %v564
    %876 = vmatprep.subr.mxu0 0.0
    %877 = vmatpush1.msra.mxu0 %v565
    %878 = vmatprep.subr.mxu0 0.0
    %879 = vmatpush1.msra.mxu0 %v566
    %880 = vmatprep.subr.mxu0 0.0
    %881 = vmatpush1.msra.mxu0 %v567
    %882 = vmatprep.subr.mxu0 0.0
    %883 = vmatpush1.msra.mxu0 %v568
    %884 = vmatprep.subr.mxu0 0.0
    %885 = vmatpush1.msra.mxu0 %v569
    %886 = vmatprep.subr.mxu0 0.0
    %887 = vmatpush1.msra.mxu0 0.0
    %888 = vmatprep.subr.mxu0 0.0
    %889 = vmatpush1.msra.mxu0 0.0
    %890 = vmatprep.subr.mxu0 0.0
    %891 = vmatpush1.msra.mxu0 0.0
    %892 = vmatprep.subr.mxu0 0.0
    %893 = vmatpush1.msra.mxu0 0.0
    %894 = vmatprep.subr.mxu0 0.0
    %895 = vmatpush1.msra.mxu0 0.0
    %896 = vmatprep.subr.mxu0 0.0
    %897 = vmatpush1.msra.mxu0 0.0
    %898 = vmatprep.subr.mxu0 0.0
    %899 = vmatpush1.msra.mxu0 0.0
    %900 = vmatprep.subr.mxu0 0.0
    %901 = vmatpush1.msra.mxu0 0.0
    %902 = vmatprep.subr.mxu0 0.0
    %903 = vmatpush1.msra.mxu0 0.0
    %904 = vmatprep.subr.mxu0 0.0
    %905 = vmatpush1.msra.mxu0 0.0
    %906 = vmatprep.subr.mxu0 0.0
    %907 = vmatpush1.msra.mxu0 0.0
    %908 = vmatprep.subr.mxu0 0.0
    %909 = vmatpush1.msra.mxu0 0.0
    %910 = vmatprep.subr.mxu0 0.0
    %911 = vmatpush1.msra.mxu0 0.0
    %912 = vmatprep.subr.mxu0 0.0
    %913 = vmatpush1.msra.mxu0 0.0
    %914 = vmatprep.subr.mxu0 0.0
    %915 = vmatpush1.msra.mxu0 0.0
    %916 = vmatprep.subr.mxu0 0.0
    %917 = vmatpush1.msra.mxu0 0.0
    %918 = vmatprep.mubr.f32.mxu0 0.0
    %919 = vmatmul.mubr.f32.gmra.mrb[0].mxu0 %v851
    %v920 = vpop.f32.mrb[0].mxu0
    %v921 = vadd.f32 0.0, %v920
    %v922 = vpop.f32.mrb[0].mxu0
    %923 = vdwg.mxu0
    %924 = vmatprep.subr.mxu0 0.0
    %925 = vmatpush1.msra.mxu0 %v570
    %926 = vmatprep.subr.mxu0 0.0
    %927 = vmatpush1.msra.mxu0 0.0
    %928 = vmatprep.subr.mxu0 0.0
    %929 = vmatpush1.msra.mxu0 0.0
    %930 = vmatprep.subr.mxu0 0.0
    %931 = vmatpush1.msra.mxu0 0.0
    %932 = vmatprep.subr.mxu0 0.0
    %933 = vmatpush1.msra.mxu0 0.0
    %934 = vmatprep.subr.mxu0 0.0
    %935 = vmatpush1.msra.mxu0 0.0
    %936 = vmatprep.subr.mxu0 0.0
    %937 = vmatpush1.msra.mxu0 0.0
    %938 = vmatprep.subr.mxu0 0.0
    %939 = vmatpush1.msra.mxu0 0.0
    %940 = vmatprep.subr.mxu0 0.0
    %941 = vmatpush1.msra.mxu0 0.0
    %942 = vmatprep.subr.mxu0 0.0
    %943 = vmatpush1.msra.mxu0 0.0
    %944 = vmatprep.subr.mxu0 0.0
    %945 = vmatpush1.msra.mxu0 0.0
    %946 = vmatprep.subr.mxu0 0.0
    %947 = vmatpush1.msra.mxu0 0.0
    %948 = vmatprep.subr.mxu0 0.0
    %949 = vmatpush1.msra.mxu0 0.0
    %950 = vmatprep.subr.mxu0 0.0
    %951 = vmatpush1.msra.mxu0 0.0
    %952 = vmatprep.subr.mxu0 0.0
    %953 = vmatpush1.msra.mxu0 0.0
    %954 = vmatprep.subr.mxu0 0.0
    %955 = vmatpush1.msra.mxu0 0.0
    %956 = vmatprep.subr.mxu0 0.0
    %957 = vmatpush1.msra.mxu0 0.0
    %958 = vmatprep.subr.mxu0 0.0
    %959 = vmatpush1.msra.mxu0 0.0
    %960 = vmatprep.subr.mxu0 0.0
    %961 = vmatpush1.msra.mxu0 0.0
    %962 = vmatprep.subr.mxu0 0.0
    %963 = vmatpush1.msra.mxu0 0.0
    %964 = vmatprep.subr.mxu0 0.0
    %965 = vmatpush1.msra.mxu0 0.0
    %966 = vmatprep.subr.mxu0 0.0
    %967 = vmatpush1.msra.mxu0 0.0
    %968 = vmatprep.subr.mxu0 0.0
    %969 = vmatpush1.msra.mxu0 0.0
    %970 = vmatprep.subr.mxu0 0.0
    %971 = vmatpush1.msra.mxu0 0.0
    %972 = vmatprep.subr.mxu0 0.0
    %973 = vmatpush1.msra.mxu0 0.0
    %974 = vmatprep.subr.mxu0 0.0
    %975 = vmatpush1.msra.mxu0 0.0
    %976 = vmatprep.subr.mxu0 0.0
    %977 = vmatpush1.msra.mxu0 0.0
    %978 = vmatprep.subr.mxu0 0.0
    %979 = vmatpush1.msra.mxu0 0.0
    %980 = vmatprep.subr.mxu0 0.0
    %981 = vmatpush1.msra.mxu0 0.0
    %982 = vmatprep.subr.mxu0 0.0
    %983 = vmatpush1.msra.mxu0 0.0
    %984 = vmatprep.subr.mxu0 0.0
    %985 = vmatpush1.msra.mxu0 0.0
    %986 = vmatprep.subr.mxu0 0.0
    %987 = vmatpush1.msra.mxu0 0.0
    %988 = vmatprep.mubr.f32.mxu0 0.0
    %989 = vmatmul.mubr.f32.gmra.mrb[0].mxu0 %v605
    %v990 = vpop.f32.mrb[0].mxu0
    %v991 = vadd.f32 0.0, %v990
    %v992 = vpop.f32.mrb[0].mxu0
    %993 = vdwg.mxu0
    %v994 = vmul.f32 %v921, %v571
    %v995 = vadd.f32 %v994, %v991
    %v996 = vlaneseq
    %v997 = vshrl.u32 %v996, 7
    %v998 = vsub.s32 0, %v997
    %v999 = vrot.slane %v574, %v998
    %v1000 = vadd.f32 %v995, %v999
    %v1001 = vxor.u32 %v1000, 2147483648
    %v1002 = vmul.f32 %v1001, 1.442695
    %v1003 = vpow.pop %v1002
    %v1004 = vadd.f32 %v1003, 1.0
    %v1005 = vrcp.pop %v1004
    %v1006 = vmul.f32 1.0, %v1005
    %1007 = vst [vmem:[#allocation2] sm:$0xff] 0.0
    %vm1008 = vcmask 130048
    %1009 = vst.msk [vmem:[#allocation2] sm:$0xff] %vm1008, %v1006
    %v1010 = vld [vmem:[#allocation2] sm:$0xff]
    %1011 = vxpose.xlu0.b32.start [1/16] %v1006, 128
    %1012 = vxpose.xlu0.b32.cont [2/16] 0.0, 128
    %1013 = vxpose.xlu0.b32.cont [3/16] 0.0, 128
    %1014 = vxpose.xlu0.b32.cont [4/16] 0.0, 128
    %1015 = vxpose.xlu0.b32.cont [5/16] 0.0, 128
    %1016 = vxpose.xlu0.b32.cont [6/16] 0.0, 128
    %1017 = vxpose.xlu0.b32.cont [7/16] 0.0, 128
    %1018 = vxpose.xlu0.b32.cont [8/16] 0.0, 128
    %1019 = vxpose.xlu0.b32.cont [9/16] 0.0, 128
    %1020 = vxpose.xlu0.b32.cont [10/16] 0.0, 128
    %1021 = vxpose.xlu0.b32.cont [11/16] 0.0, 128
    %1022 = vxpose.xlu0.b32.cont [12/16] 0.0, 128
    %1023 = vxpose.xlu0.b32.cont [13/16] 0.0, 128
    %1024 = vxpose.xlu0.b32.cont [14/16] 0.0, 128
    %1025 = vxpose.xlu0.b32.cont [15/16] 0.0, 128
    %1026 = vxpose.xlu0.b32.end [16/16] 0.0, 128
    %v1027 = vpop.trf.xlu0
    %v1028 = vpop.trf.xlu0
    %v1029 = vpop.trf.xlu0
    %v1030 = vpop.trf.xlu0
    %v1031 = vpop.trf.xlu0
    %v1032 = vpop.trf.xlu0
    %v1033 = vpop.trf.xlu0
    %v1034 = vpop.trf.xlu0
    %v1035 = vpop.trf.xlu0
    %v1036 = vpop.trf.xlu0
    %v1037 = vpop.trf.xlu0
    %v1038 = vpop.trf.xlu0
    %v1039 = vpop.trf.xlu0
    %v1040 = vpop.trf.xlu0
    %v1041 = vpop.trf.xlu0
    %v1042 = vpop.trf.xlu0
    %v1044 = vsel %vm120, %v1027, 0
    %v1047 = vsel %vm120, %v1028, 0
    %1049 = vmatprep.subr.mxu0 0.0
    %1050 = vmatpush1.msra.mxu0 %v1010
    %1051 = vmatprep.subr.mxu0 0.0
    %1052 = vmatpush1.msra.mxu0 0.0
    %1053 = vmatprep.subr.mxu0 0.0
    %1054 = vmatpush1.msra.mxu0 0.0
    %1055 = vmatprep.subr.mxu0 0.0
    %1056 = vmatpush1.msra.mxu0 0.0
    %1057 = vmatprep.subr.mxu0 0.0
    %1058 = vmatpush1.msra.mxu0 0.0
    %1059 = vmatprep.subr.mxu0 0.0
    %1060 = vmatpush1.msra.mxu0 0.0
    %1061 = vmatprep.subr.mxu0 0.0
    %1062 = vmatpush1.msra.mxu0 0.0
    %1063 = vmatprep.subr.mxu0 0.0
    %1064 = vmatpush1.msra.mxu0 0.0
    %1065 = vmatprep.subr.mxu0 0.0
    %1066 = vmatpush1.msra.mxu0 0.0
    %1067 = vmatprep.subr.mxu0 0.0
    %1068 = vmatpush1.msra.mxu0 0.0
    %1069 = vmatprep.subr.mxu0 0.0
    %1070 = vmatpush1.msra.mxu0 0.0
    %1071 = vmatprep.subr.mxu0 0.0
    %1072 = vmatpush1.msra.mxu0 0.0
    %1073 = vmatprep.subr.mxu0 0.0
    %1074 = vmatpush1.msra.mxu0 0.0
    %1075 = vmatprep.subr.mxu0 0.0
    %1076 = vmatpush1.msra.mxu0 0.0
    %1077 = vmatprep.subr.mxu0 0.0
    %1078 = vmatpush1.msra.mxu0 0.0
    %1079 = vmatprep.subr.mxu0 0.0
    %1080 = vmatpush1.msra.mxu0 0.0
    %1081 = vmatprep.subr.mxu0 0.0
    %1082 = vmatpush1.msra.mxu0 0.0
    %1083 = vmatprep.subr.mxu0 0.0
    %1084 = vmatpush1.msra.mxu0 0.0
    %1085 = vmatprep.subr.mxu0 0.0
    %1086 = vmatpush1.msra.mxu0 0.0
    %1087 = vmatprep.subr.mxu0 0.0
    %1088 = vmatpush1.msra.mxu0 0.0
    %1089 = vmatprep.subr.mxu0 0.0
    %1090 = vmatpush1.msra.mxu0 0.0
    %1091 = vmatprep.subr.mxu0 0.0
    %1092 = vmatpush1.msra.mxu0 0.0
    %1093 = vmatprep.subr.mxu0 0.0
    %1094 = vmatpush1.msra.mxu0 0.0
    %1095 = vmatprep.subr.mxu0 0.0
    %1096 = vmatpush1.msra.mxu0 0.0
    %1097 = vmatprep.subr.mxu0 0.0
    %1098 = vmatpush1.msra.mxu0 0.0
    %1099 = vmatprep.subr.mxu0 0.0
    %1100 = vmatpush1.msra.mxu0 0.0
    %1101 = vmatprep.subr.mxu0 0.0
    %1102 = vmatpush1.msra.mxu0 0.0
    %1103 = vmatprep.subr.mxu0 0.0
    %1104 = vmatpush1.msra.mxu0 0.0
    %1105 = vmatprep.subr.mxu0 0.0
    %1106 = vmatpush1.msra.mxu0 0.0
    %1107 = vmatprep.subr.mxu0 0.0
    %1108 = vmatpush1.msra.mxu0 0.0
    %1109 = vmatprep.subr.mxu0 0.0
    %1110 = vmatpush1.msra.mxu0 0.0
    %1111 = vmatprep.subr.mxu0 0.0
    %1112 = vmatpush1.msra.mxu0 0.0
    %1113 = vmatprep.mubr.f32.mxu0 0.0
    %1114 = vmatmul.mubr.f32.gmra.mrb[0].mxu0 %v1044
    %v1115 = vpop.f32.mrb[0].mxu0
    %v1116 = vadd.f32 0.0, %v1115
    %v1117 = vpop.f32.mrb[0].mxu0
    %1118 = vmatprep.mubr.f32.mxu0 0.0
    %1119 = vmatmul.mubr.f32.gmra.mrb[0].mxu0 %v1047
    %v1120 = vpop.f32.mrb[0].mxu0
    %v1121 = vadd.f32 0.0, %v1120
    %v1122 = vpop.f32.mrb[0].mxu0
    %1123 = vdwg.mxu0
    %v1124 = vmax.f32 %v1116, %v1121
    %1125 = vmax.xlane.f32.xlu0 %v1124
    %v1126 = vpop.xlane.xlu0 %1125
    %v1127 = vrot.slane %v1126, 4
    %v1128 = vmax.f32 %v1126, %v1127
    %v1129 = vrot.slane %v1128, 2
    %v1130 = vmax.f32 %v1128, %v1129
    %v1131 = vrot.slane %v1130, 1
    %v1132 = vmax.f32 %v1130, %v1131
    %s1133 = vtos %v1132
    %v1134 = vstv %s1133
    %v1135 = vrcp.pop %v1134
    %v1136 = vmul.f32 %v1116, %v1135
    %v1137 = vmul.f32 %v1121, %v1135
    %v1138 = vlaneseq
    %v1139 = vshrl.u32 %v1138, 7
    %v1140 = vadd.s32 %v1139, 8
    %v1141 = vlaneseq
    %v1142 = vand.u32 %v1141, 127
    %vm1143 = vcmp.eq.s32.totalorder %v1139, %v1142
    %vm1144 = vcmp.eq.s32.totalorder %v1140, %v1142
    %v1145 = vsel %vm1143, 1.0, %v1136
    %v1146 = vsel %vm1144, 1.0, %v1137
    %1147 = vst [vmem:[#allocation6] sm:$0xff] %v1145
    %1148 = vst [vmem:[#allocation6 + $0x8] sm:$0xff] %v1146
    // Predicated region
    $region14: #{generator_forward.1} parent=1 // pred_check
      _
    $region15: #{generator_forward.1} parent=1 // pred_check_branch
      %1150 = sbr.rel (0) target = $region17
    $region16: #{generator_forward.1} parent=1 // pred_region
      %s1152 = ssub.s32 256, 256
      %1153 = vsyncadd [#allocation5], %s1152
      %s1154 = sshll.u32 [#allocation6], 4
      %s1155 = int_to_ptr.vmem [resolvable:$true] %s1154
      %1160 = dma.vmem_to_hbm [thread:$0]  %s1155, 256, %s2, [#allocation5], 128, 128, 8
    $region17: #{generator_forward.1} parent=1 // pred_fallthru
      _
    // Predicated region
    $region18: #{generator_forward.1} parent=1 // pred_check
      _
    $region19: #{generator_forward.1} parent=1 // pred_check_branch
      %1162 = sbr.rel (0) target = $region21
    $region20: #{generator_forward.1} parent=1 // pred_region
      %1163 = dma.done [#allocation5], 256
    $region21: #{generator_forward.1} parent=1 // pred_fallthru
      _
    %1164 = vsyncpa [#allocation4], 1
    %1165 = vsyncpa [#allocation5], 1

</llo_original>
